<compile_context>
chip_gen: v7x
topology: tpu7x:2x2x1
jax: 0.10.0
libtpu: 0.0.40
codegen_flags: <defaults>
</compile_context>

<pallas_src>
import functools

import jax
import jax.numpy as jnp
from jax import lax
from jax.experimental import pallas as pl
from jax.experimental.pallas import tpu as pltpu

_LANES = 128
# Per-grid-step working set = double-buffered input tiles + ~8 full-tile f32
# temporaries (casts, sigmoid, products).  Kept under the scoped-VMEM request.
_VMEM_WORKSET_BYTES = 24 * 1024 * 1024
_VMEM_LIMIT_BYTES = 32 * 1024 * 1024   # <= default scoped VMEM on v6e/v7x, << v5e physical
_TEMP_ROW_BYTES = 8 * _LANES * 4       # allowance for in-kernel f32 temporaries
_MAX_BLOCK_ROWS = 8192
_NUM_CORE_SPLITS = 2                   # leading "parallel" grid axis (v7x: 2 TCs)


def _dice_stats_kernel(p_ref, t_ref, out_ref, *, steps_per_core, num_full,
                       rem_rows, all_blocks_full):
    """Accumulate per-lane partial dice statistics into the resident out block.

    out_ref block is (1, 6, 1, 128) f32, revisited across the inner grid axis:
      slot 0: sum(p * t)           slot 1: sum(p)
      slot 2: sum(sigmoid(p) * t)  slot 3: sum(sigmoid(p))
      slot 4: sum(t)               slot 5: running elementwise max(p)
    """
    c = pl.program_id(0)
    s = pl.program_id(1)

    @pl.when(s == 0)
    def _init():
        out_ref[...] = jnp.zeros_like(out_ref)

    def _accumulate(pv, tv):
        pv = pv.astype(jnp.float32)
        tv = tv.astype(jnp.float32)
        # TODO(synk): on v7x, if sigmoid lowers with a VALU divide, switch to
        # pl.reciprocal(1.0 + jnp.exp(-pv), approx=True) (+1 NR step) so both
        # exp and reciprocal ride the otherwise-idle EUP slot.
        spv = jax.nn.sigmoid(pv)
        out_ref[0, 0] += jnp.sum(pv * tv, axis=0, keepdims=True)
        out_ref[0, 1] += jnp.sum(pv, axis=0, keepdims=True)
        out_ref[0, 2] += jnp.sum(spv * tv, axis=0, keepdims=True)
        out_ref[0, 3] += jnp.sum(spv, axis=0, keepdims=True)
        out_ref[0, 4] += jnp.sum(tv, axis=0, keepdims=True)
        out_ref[0, 5] = jnp.maximum(out_ref[0, 5],
                                    jnp.max(pv, axis=0, keepdims=True))

    if all_blocks_full:
        # Every covered block is fully valid: no masking / branching emitted.
        _accumulate(p_ref[...], t_ref[...])
    else:
        blk = c * steps_per_core + s          # logical block index (tiny ints)

        @pl.when(blk < num_full)
        def _full_block():
            _accumulate(p_ref[...], t_ref[...])

        if rem_rows:                          # static: a ragged last block exists
            @pl.when(blk == num_full)
            def _ragged_block():
                # Only the first rem_rows rows of this block are real data; a
                # static ref slice loads exactly those (no iota mask needed).
                _accumulate(p_ref[0:rem_rows, :], t_ref[0:rem_rows, :])
        # blk > num_full: padding blocks of the per-core split -> skipped.


def _prep_predictions(x):
    if x.dtype == jnp.float32 or x.dtype == jnp.bfloat16:
        return x
    return x.astype(jnp.float32)


def _prep_targets(x):
    # Stream segmentation masks in their native (narrow) dtype; the cast to
    # f32 happens inside the kernel, keeping HBM traffic at 1 byte/elem.
    if x.dtype == jnp.float32 or x.dtype == jnp.bfloat16:
        return x
    if jnp.issubdtype(x.dtype, jnp.floating):
        return x.astype(jnp.float32)
    if x.dtype == jnp.bool_:
        return x.astype(jnp.int8)
    if x.dtype in (jnp.int8, jnp.uint8, jnp.int32, jnp.uint32):
        return x
    return x.astype(jnp.int32)


def dice_loss(predictions, targets, smooth: float = 1e-06,
              reduction: str = "mean", max_block_rows: int | None = None):
    """Pallas TPU implementation of DiceLoss.forward."""
    p_flat = jnp.reshape(_prep_predictions(predictions), (-1,))
    t_flat = jnp.reshape(_prep_targets(targets), (-1,))
    numel = p_flat.shape[0]

    main = (numel // _LANES) * _LANES
    tail = numel - main

    sums = jnp.zeros((5,), jnp.float32)
    pmax = jnp.float32(-jnp.inf)

    if main:
        rows = main // _LANES
        # The 128-aligned common case is copy-free; only ragged sizes pay one
        # slice copy per input.
        # TODO(synk): avoid that copy too with pl.ANY + manual DMA on the flat refs.
        p_main = p_flat if tail == 0 else p_flat[:main]
        t_main = t_flat if tail == 0 else t_flat[:main]
        p2 = p_main.reshape(rows, _LANES)
        t2 = t_main.reshape(rows, _LANES)

        # Block sizing: biggest tile whose double-buffered inputs + in-kernel
        # f32 temporaries fit the scoped-VMEM request (f32/f32 -> 4096 rows,
        # i.e. 4 MiB of input data per grid step; larger for narrow dtypes).
        row_bytes = (2 * _LANES * (p2.dtype.itemsize + t2.dtype.itemsize)
                     + _TEMP_ROW_BYTES)
        br = min(_VMEM_WORKSET_BYTES // row_bytes, _MAX_BLOCK_ROWS)
        if max_block_rows is not None:
            br = min(br, max_block_rows)
        br = max(32, (br // 32) * 32)       # multiple of 32: valid for int8/bf16/f32 tiles
        block_rows = rows if rows <= br else br

        nblocks = pl.cdiv(rows, block_rows)
        num_cores = _NUM_CORE_SPLITS if nblocks >= 2 else 1
        steps_per_core = pl.cdiv(nblocks, num_cores)
        num_full = rows // block_rows
        rem_rows = rows % block_rows
        all_blocks_full = (rem_rows == 0) and (num_cores * steps_per_core == num_full)

        def in_map(c, s):
            # Clamp so a DMA never starts past the end of the array; logically
            # out-of-range blocks are skipped inside the kernel.
            return (jnp.minimum(c * steps_per_core + s, nblocks - 1), 0)

        stats = pl.pallas_call(
            functools.partial(_dice_stats_kernel,
                              steps_per_core=steps_per_core,
                              num_full=num_full,
                              rem_rows=rem_rows,
                              all_blocks_full=all_blocks_full),
            out_shape=jax.ShapeDtypeStruct((num_cores, 6, 1, _LANES), jnp.float32),
            grid_spec=pltpu.PrefetchScalarGridSpec(
                num_scalar_prefetch=0,
                grid=(num_cores, steps_per_core),
                in_specs=[pl.BlockSpec((block_rows, _LANES), in_map),
                          pl.BlockSpec((block_rows, _LANES), in_map)],
                out_specs=pl.BlockSpec((1, 6, 1, _LANES),
                                       lambda c, s: (c, 0, 0, 0)),
            ),
            compiler_params=pltpu.CompilerParams(
                dimension_semantics=("parallel", "arbitrary"),
                vmem_limit_bytes=_VMEM_LIMIT_BYTES),
        )(p2, t2)

        sums = jnp.sum(stats[:, :5, 0, :], axis=(0, 2))   # (5,) cross-lane/core combine
        pmax = jnp.max(stats[:, 5, 0, :])

    sum_pt, sum_p, sum_spt, sum_sp, sum_t = (sums[0], sums[1], sums[2],
                                             sums[3], sums[4])

    if tail:
        # <128 leftover elements: tiny jnp epilogue instead of padding.
        p_tail = p_flat[main:].astype(jnp.float32)
        t_tail = t_flat[main:].astype(jnp.float32)
        sp_tail = jax.nn.sigmoid(p_tail)
        sum_pt = sum_pt + jnp.sum(p_tail * t_tail)
        sum_p = sum_p + jnp.sum(p_tail)
        sum_spt = sum_spt + jnp.sum(sp_tail * t_tail)
        sum_sp = sum_sp + jnp.sum(sp_tail)
        sum_t = sum_t + jnp.sum(t_tail)
        pmax = jnp.maximum(pmax, jnp.max(p_tail))

    use_sig = pmax > 1.0          # torch: `if predictions.max() > 1: sigmoid(...)`
    inter = jnp.where(use_sig, sum_spt, sum_pt)
    psum = jnp.where(use_sig, sum_sp, sum_p)
    smooth = jnp.float32(smooth)
    dice = (2.0 * inter + smooth) / (psum + sum_t + smooth)
    loss = 1.0 - dice

    if reduction == "mean":
        return loss
    elif reduction == "sum":
        return loss * numel
    return loss


def _dice_loss_ref(predictions, targets, smooth=1e-06, reduction="mean"):
    """Pure-JAX reference mirroring the PyTorch module."""
    p = jnp.reshape(predictions, (-1,)).astype(jnp.float32)
    t = jnp.reshape(targets, (-1,)).astype(jnp.float32)
    p = jnp.where(jnp.max(p) > 1, jax.nn.sigmoid(p), p)
    inter = jnp.sum(p * t)
    dice = (2.0 * inter + smooth) / (jnp.sum(p) + jnp.sum(t) + smooth)
    loss = 1.0 - dice
    if reduction == "mean":
        return loss
    elif reduction == "sum":
        return loss * p.shape[0]
    return loss


if __name__ == "__main__":
    key = jax.random.PRNGKey(0)
    k1, k2, k3, k4, k5, k6 = jax.random.split(key, 6)

    # Segmentation-head-like shape: (B, C, H, W)
    x_shape = (2, 4, 16, 16)
    logits = jax.random.normal(k1, x_shape, dtype=jnp.float32) * 3.0
    targets = (jax.random.uniform(k2, x_shape) > 0.5).astype(jnp.float32)

    # 1) sigmoid path (max > 1), 128-aligned numel
    out = jax.block_until_ready(dice_loss(logits, targets))
    ref = _dice_loss_ref(logits, targets)
    assert jnp.allclose(out, ref, atol=1e-5, rtol=1e-5), (out, ref)

    # 2) raw path (max <= 1 -> no sigmoid applied)
    probs = jax.nn.sigmoid(logits)
    out2 = jax.block_until_ready(dice_loss(probs, targets))
    ref2 = _dice_loss_ref(probs, targets)
    assert jnp.allclose(out2, ref2, atol=1e-5, rtol=1e-5), (out2, ref2)

    # 3) ragged numel (not a multiple of 128) -> wrapper tail epilogue
    y_shape = (3, 5, 7, 11)
    logits_r = jax.random.normal(k3, y_shape, dtype=jnp.float32) * 3.0
    tgts_r = (jax.random.uniform(k4, y_shape) > 0.5).astype(jnp.float32)
    out3 = jax.block_until_ready(dice_loss(logits_r, tgts_r))
    ref3 = _dice_loss_ref(logits_r, tgts_r)
    assert jnp.allclose(out3, ref3, atol=1e-5, rtol=1e-5), (out3, ref3)

    # 4) bf16 predictions streamed natively (cast to f32 inside the kernel)
    out4 = jax.block_until_ready(dice_loss(logits.astype(jnp.bfloat16), targets))
    ref4 = _dice_loss_ref(logits.astype(jnp.bfloat16), targets)
    assert jnp.allclose(out4, ref4, atol=2e-3, rtol=2e-3), (out4, ref4)

    # 5) multi-block grid + 2-way core split + ragged last block + bool
    #    targets (native int8 stream) + tail epilogue, via a forced small block.
    n = 1000 * 128 + 37
    logits_big = jax.random.normal(k5, (n,), dtype=jnp.float32) * 2.0
    tgts_big = jax.random.uniform(k6, (n,)) > 0.5
    out5 = jax.block_until_ready(dice_loss(logits_big, tgts_big,
                                           max_block_rows=256))
    ref5 = _dice_loss_ref(logits_big, tgts_big)
    assert jnp.allclose(out5, ref5, atol=1e-4, rtol=1e-4), (out5, ref5)

    # 6) reduction='sum'
    out6 = jax.block_until_ready(dice_loss(logits, targets, reduction="sum"))
    ref6 = _dice_loss_ref(logits, targets, reduction="sum")
    assert jnp.allclose(out6, ref6, atol=1e-3, rtol=1e-5), (out6, ref6)

    print("KERNEL_OK")
</pallas_src>

<mosaic_0001>
module attributes {stable_mosaic.version = 11 : i64} {
  func.func @_dice_stats_kernel(%arg0: i32, %arg1: i32, %arg2: memref<16x128xf32, #tpu.memory_space<vmem>>, %arg3: memref<16x128xf32, #tpu.memory_space<vmem>>, %arg4: memref<1x6x1x128xf32, #tpu.memory_space<vmem>>) attributes {dimension_semantics = [#tpu.dimension_semantics<parallel>, #tpu.dimension_semantics<arbitrary>], iteration_bounds = array<i64: 1, 1>, scalar_prefetch = 0 : i64, scratch_operands = 0 : i64, tpu.core_type = #tpu.core_type<tc>, window_params = [{transform_indices = @transform_0, window_bounds = array<i64: 16, 128>}, {transform_indices = @transform_1, window_bounds = array<i64: 16, 128>}, {transform_indices = @transform_2, window_bounds = array<i64: 1, 6, 1, 128>}]} {
    %c0_i32 = arith.constant 0 : i32
    %0 = arith.cmpi eq, %arg1, %c0_i32 : i32
    %1 = arith.extui %0 : i1 to i32
    %c0_i32_0 = arith.constant 0 : i32
    %2 = arith.cmpi ne, %1, %c0_i32_0 : i32
    scf.if %2 {
      %cst_53 = arith.constant 0.000000e+00 : f32
      %60 = vector.broadcast %cst_53 : f32 to vector<1x6x1x128xf32>
      %c0_54 = arith.constant 0 : index
      %c0_55 = arith.constant 0 : index
      %c0_56 = arith.constant 0 : index
      %c0_57 = arith.constant 0 : index
      %61 = vector.load %arg4[%c0_54, %c0_55, %c0_56, %c0_57] : memref<1x6x1x128xf32, #tpu.memory_space<vmem>>, vector<1x6x1x128xf32>
      tpu.vector_store %arg4[%c0_54, %c0_55, %c0_56, %c0_57], %60 {strides = array<i32>} : memref<1x6x1x128xf32, #tpu.memory_space<vmem>>, vector<1x6x1x128xf32>,
    } else {
    }
    %c0 = arith.constant 0 : index
    %c0_1 = arith.constant 0 : index
    %3 = vector.load %arg2[%c0, %c0_1] : memref<16x128xf32, #tpu.memory_space<vmem>>, vector<16x128xf32>
    %c0_2 = arith.constant 0 : index
    %c0_3 = arith.constant 0 : index
    %4 = vector.load %arg3[%c0_2, %c0_3] : memref<16x128xf32, #tpu.memory_space<vmem>>, vector<16x128xf32>
    %5 = arith.negf %3 : vector<16x128xf32>
    %6 = math.exp %5 : vector<16x128xf32>
    %cst = arith.constant 1.000000e+00 : f32
    %7 = vector.broadcast %cst : f32 to vector<16x128xf32>
    %8 = arith.addf %7, %6 : vector<16x128xf32>
    %9 = arith.divf %7, %8 : vector<16x128xf32>
    %c0_4 = arith.constant 0 : index
    %c0_5 = arith.constant 0 : index
    %c0_6 = arith.constant 0 : index
    %c0_7 = arith.constant 0 : index
    %10 = vector.load %arg4[%c0_4, %c0_5, %c0_6, %c0_7] : memref<1x6x1x128xf32, #tpu.memory_space<vmem>>, vector<1x1x1x128xf32>
    %11 = vector.shape_cast %10 : vector<1x1x1x128xf32> to vector<1x128xf32>
    %12 = arith.mulf %3, %4 : vector<16x128xf32>
    %cst_8 = arith.constant dense<0.000000e+00> : vector<128xf32>
    %13 = vector.multi_reduction <add>, %12, %cst_8 [0] : vector<16x128xf32> to vector<128xf32>
    %14 = vector.shape_cast %13 : vector<128xf32> to vector<1x128xf32>
    %15 = arith.addf %11, %14 : vector<1x128xf32>
    %c0_9 = arith.constant 0 : index
    %c0_10 = arith.constant 0 : index
    %c0_11 = arith.constant 0 : index
    %c0_12 = arith.constant 0 : index
    %16 = vector.load %arg4[%c0_9, %c0_10, %c0_11, %c0_12] : memref<1x6x1x128xf32, #tpu.memory_space<vmem>>, vector<1x1x1x128xf32>
    %17 = vector.shape_cast %16 : vector<1x1x1x128xf32> to vector<1x128xf32>
    %18 = vector.shape_cast %15 : vector<1x128xf32> to vector<1x1x1x128xf32>
    tpu.vector_store %arg4[%c0_9, %c0_10, %c0_11, %c0_12], %18 {strides = array<i32>} : memref<1x6x1x128xf32, #tpu.memory_space<vmem>>, vector<1x1x1x128xf32>,
    %c0_13 = arith.constant 0 : index
    %c1 = arith.constant 1 : index
    %c0_14 = arith.constant 0 : index
    %c0_15 = arith.constant 0 : index
    %19 = vector.load %arg4[%c0_13, %c1, %c0_14, %c0_15] : memref<1x6x1x128xf32, #tpu.memory_space<vmem>>, vector<1x1x1x128xf32>
    %20 = vector.shape_cast %19 : vector<1x1x1x128xf32> to vector<1x128xf32>
    %cst_16 = arith.constant dense<0.000000e+00> : vector<128xf32>
    %21 = vector.multi_reduction <add>, %3, %cst_16 [0] : vector<16x128xf32> to vector<128xf32>
    %22 = vector.shape_cast %21 : vector<128xf32> to vector<1x128xf32>
    %23 = arith.addf %20, %22 : vector<1x128xf32>
    %c0_17 = arith.constant 0 : index
    %c1_18 = arith.constant 1 : index
    %c0_19 = arith.constant 0 : index
    %c0_20 = arith.constant 0 : index
    %24 = vector.load %arg4[%c0_17, %c1_18, %c0_19, %c0_20] : memref<1x6x1x128xf32, #tpu.memory_space<vmem>>, vector<1x1x1x128xf32>
    %25 = vector.shape_cast %24 : vector<1x1x1x128xf32> to vector<1x128xf32>
    %26 = vector.shape_cast %23 : vector<1x128xf32> to vector<1x1x1x128xf32>
    tpu.vector_store %arg4[%c0_17, %c1_18, %c0_19, %c0_20], %26 {strides = array<i32>} : memref<1x6x1x128xf32, #tpu.memory_space<vmem>>, vector<1x1x1x128xf32>,
    %c0_21 = arith.constant 0 : index
    %c2 = arith.constant 2 : index
    %c0_22 = arith.constant 0 : index
    %c0_23 = arith.constant 0 : index
    %27 = vector.load %arg4[%c0_21, %c2, %c0_22, %c0_23] : memref<1x6x1x128xf32, #tpu.memory_space<vmem>>, vector<1x1x1x128xf32>
    %28 = vector.shape_cast %27 : vector<1x1x1x128xf32> to vector<1x128xf32>
    %29 = arith.mulf %9, %4 : vector<16x128xf32>
    %cst_24 = arith.constant dense<0.000000e+00> : vector<128xf32>
    %30 = vector.multi_reduction <add>, %29, %cst_24 [0] : vector<16x128xf32> to vector<128xf32>
    %31 = vector.shape_cast %30 : vector<128xf32> to vector<1x128xf32>
    %32 = arith.addf %28, %31 : vector<1x128xf32>
    %c0_25 = arith.constant 0 : index
    %c2_26 = arith.constant 2 : index
    %c0_27 = arith.constant 0 : index
    %c0_28 = arith.constant 0 : index
    %33 = vector.load %arg4[%c0_25, %c2_26, %c0_27, %c0_28] : memref<1x6x1x128xf32, #tpu.memory_space<vmem>>, vector<1x1x1x128xf32>
    %34 = vector.shape_cast %33 : vector<1x1x1x128xf32> to vector<1x128xf32>
    %35 = vector.shape_cast %32 : vector<1x128xf32> to vector<1x1x1x128xf32>
    tpu.vector_store %arg4[%c0_25, %c2_26, %c0_27, %c0_28], %35 {strides = array<i32>} : memref<1x6x1x128xf32, #tpu.memory_space<vmem>>, vector<1x1x1x128xf32>,
    %c0_29 = arith.constant 0 : index
    %c3 = arith.constant 3 : index
    %c0_30 = arith.constant 0 : index
    %c0_31 = arith.constant 0 : index
    %36 = vector.load %arg4[%c0_29, %c3, %c0_30, %c0_31] : memref<1x6x1x128xf32, #tpu.memory_space<vmem>>, vector<1x1x1x128xf32>
    %37 = vector.shape_cast %36 : vector<1x1x1x128xf32> to vector<1x128xf32>
    %cst_32 = arith.constant dense<0.000000e+00> : vector<128xf32>
    %38 = vector.multi_reduction <add>, %9, %cst_32 [0] : vector<16x128xf32> to vector<128xf32>
    %39 = vector.shape_cast %38 : vector<128xf32> to vector<1x128xf32>
    %40 = arith.addf %37, %39 : vector<1x128xf32>
    %c0_33 = arith.constant 0 : index
    %c3_34 = arith.constant 3 : index
    %c0_35 = arith.constant 0 : index
    %c0_36 = arith.constant 0 : index
    %41 = vector.load %arg4[%c0_33, %c3_34, %c0_35, %c0_36] : memref<1x6x1x128xf32, #tpu.memory_space<vmem>>, vector<1x1x1x128xf32>
    %42 = vector.shape_cast %41 : vector<1x1x1x128xf32> to vector<1x128xf32>
    %43 = vector.shape_cast %40 : vector<1x128xf32> to vector<1x1x1x128xf32>
    tpu.vector_store %arg4[%c0_33, %c3_34, %c0_35, %c0_36], %43 {strides = array<i32>} : memref<1x6x1x128xf32, #tpu.memory_space<vmem>>, vector<1x1x1x128xf32>,
    %c0_37 = arith.constant 0 : index
    %c4 = arith.constant 4 : index
    %c0_38 = arith.constant 0 : index
    %c0_39 = arith.constant 0 : index
    %44 = vector.load %arg4[%c0_37, %c4, %c0_38, %c0_39] : memref<1x6x1x128xf32, #tpu.memory_space<vmem>>, vector<1x1x1x128xf32>
    %45 = vector.shape_cast %44 : vector<1x1x1x128xf32> to vector<1x128xf32>
    %cst_40 = arith.constant dense<0.000000e+00> : vector<128xf32>
    %46 = vector.multi_reduction <add>, %4, %cst_40 [0] : vector<16x128xf32> to vector<128xf32>
    %47 = vector.shape_cast %46 : vector<128xf32> to vector<1x128xf32>
    %48 = arith.addf %45, %47 : vector<1x128xf32>
    %c0_41 = arith.constant 0 : index
    %c4_42 = arith.constant 4 : index
    %c0_43 = arith.constant 0 : index
    %c0_44 = arith.constant 0 : index
    %49 = vector.load %arg4[%c0_41, %c4_42, %c0_43, %c0_44] : memref<1x6x1x128xf32, #tpu.memory_space<vmem>>, vector<1x1x1x128xf32>
    %50 = vector.shape_cast %49 : vector<1x1x1x128xf32> to vector<1x128xf32>
    %51 = vector.shape_cast %48 : vector<1x128xf32> to vector<1x1x1x128xf32>
    tpu.vector_store %arg4[%c0_41, %c4_42, %c0_43, %c0_44], %51 {strides = array<i32>} : memref<1x6x1x128xf32, #tpu.memory_space<vmem>>, vector<1x1x1x128xf32>,
    %c0_45 = arith.constant 0 : index
    %c5 = arith.constant 5 : index
    %c0_46 = arith.constant 0 : index
    %c0_47 = arith.constant 0 : index
    %52 = vector.load %arg4[%c0_45, %c5, %c0_46, %c0_47] : memref<1x6x1x128xf32, #tpu.memory_space<vmem>>, vector<1x1x1x128xf32>
    %53 = vector.shape_cast %52 : vector<1x1x1x128xf32> to vector<1x128xf32>
    %cst_48 = arith.constant dense<0xFF800000> : vector<128xf32>
    %54 = vector.multi_reduction <maximumf>, %3, %cst_48 [0] : vector<16x128xf32> to vector<128xf32>
    %55 = vector.shape_cast %54 : vector<128xf32> to vector<1x128xf32>
    %56 = arith.maximumf %53, %55 : vector<1x128xf32>
    %c0_49 = arith.constant 0 : index
    %c5_50 = arith.constant 5 : index
    %c0_51 = arith.constant 0 : index
    %c0_52 = arith.constant 0 : index
    %57 = vector.load %arg4[%c0_49, %c5_50, %c0_51, %c0_52] : memref<1x6x1x128xf32, #tpu.memory_space<vmem>>, vector<1x1x1x128xf32>
    %58 = vector.shape_cast %57 : vector<1x1x1x128xf32> to vector<1x128xf32>
    %59 = vector.shape_cast %56 : vector<1x128xf32> to vector<1x1x1x128xf32>
    tpu.vector_store %arg4[%c0_49, %c5_50, %c0_51, %c0_52], %59 {strides = array<i32>} : memref<1x6x1x128xf32, #tpu.memory_space<vmem>>, vector<1x1x1x128xf32>,
    return
  }
  func.func @transform_0(%arg0: i32, %arg1: i32) -> (i32, i32) {
    %c1_i32 = arith.constant 1 : i32
    %0 = arith.muli %arg0, %c1_i32 : i32
    %1 = arith.addi %0, %arg1 : i32
    %c0_i32 = arith.constant 0 : i32
    %2 = arith.minsi %1, %c0_i32 : i32
    %c0_i32_0 = arith.constant 0 : i32
    %c0_i32_1 = arith.constant 0 : i32
    return %2, %c0_i32_0 : i32, i32
  }
  func.func @transform_1(%arg0: i32, %arg1: i32) -> (i32, i32) {
    %c1_i32 = arith.constant 1 : i32
    %0 = arith.muli %arg0, %c1_i32 : i32
    %1 = arith.addi %0, %arg1 : i32
    %c0_i32 = arith.constant 0 : i32
    %2 = arith.minsi %1, %c0_i32 : i32
    %c0_i32_0 = arith.constant 0 : i32
    %c0_i32_1 = arith.constant 0 : i32
    return %2, %c0_i32_0 : i32, i32
  }
  func.func @transform_2(%arg0: i32, %arg1: i32) -> (i32, i32, i32, i32) {
    %c0_i32 = arith.constant 0 : i32
    %c0_i32_0 = arith.constant 0 : i32
    %c0_i32_1 = arith.constant 0 : i32
    %c0_i32_2 = arith.constant 0 : i32
    return %arg0, %c0_i32, %c0_i32_0, %c0_i32_1 : i32, i32, i32, i32
  }
}

</mosaic_0001>

<llo_original>
// kernel: tpu_custom_call.1
$region0: #{tpu_custom_call.1}
  #allocation0 [shape = 'u32[]', space=smem, size = 0x4, offset = 0x4, fixed_abs, tag = 'smem constant byte address 0x4 - core index']
  #allocation1 [shape = 'u32[144,128]{1,0:T(1,128)}', space=vmem, size = 0x12000, scoped, tag = 'internal scratch']
  %s0 = inlined_call_operand.hbm [shape: f32[16,128], index: 0, kind: input, shape index: {}]
  %s1 = inlined_call_operand.hbm [shape: f32[16,128], index: 1, kind: input, shape index: {}]
  %s2 = inlined_call_operand.hbm [shape: f32[1,6,1,128], index: 2, kind: output, shape index: {}]
  %s3 = sld [smem:[#allocation0]]
  $region30: #{tpu_custom_call.1} parent=0
    _
  %s5 = ssub.s32 1, %s3
  %s6 = scalar_select 0, %s5, %s3
  $region1: #{tpu_custom_call.1} parent=0
    #allocation2 [shape = 'u8[8192]{0}', space=vmem, size = 0x2000, scoped, tag = 'input window, operand 0, single buffered']
    #allocation3 [shape = 's32[1]{0}', space=sflag, size = 0x4, scoped, tag = 'scoped memory for tpu_custom_call.1']
    #allocation4 [shape = 's32[1]{0}', space=sflag, size = 0x4, scoped, tag = 'scoped memory for tpu_custom_call.1']
    #allocation5 [shape = 'u8[8192]{0}', space=vmem, size = 0x2000, scoped, tag = 'input window, operand 1, single buffered']
    #allocation6 [shape = 's32[1]{0}', space=sflag, size = 0x4, scoped, tag = 'scoped memory for tpu_custom_call.1']
    #allocation7 [shape = 'u8[3072]{0}', space=vmem, size = 0xc00, scoped, tag = 'output window, operand 0, single buffered']
    %7 = vsyncpa [#allocation3], 0
    %8 = vsyncpa [#allocation6], 0
    %9 = vsyncpa [#allocation4], 0
    // Predicated region
    $region2: #{tpu_custom_call.1} parent=1 // pred_check
      _
    $region3: #{tpu_custom_call.1} parent=1 // pred_check_branch
      %11 = sbr.rel (0) target = $region5
    $region4: #{tpu_custom_call.1} parent=1 // pred_region
      %s12 = sadd.s32 0, 0
      %p13 = scmp.lt.s32.totalorder %s12, 0
      %s14 = scalar_select %p13, %s12, 0
      %s15 = smul.u32 2, %s14
      %s17 = ssub.s32 256, 256
      %18 = vsyncadd [#allocation3], %s17
      %s19 = smul.addr %s15, 128
      %s20 = scalar_lea.hbm %s0, %s19
      %s21 = sshll.u32 [#allocation2], 4
      %s22 = int_to_ptr.vmem [resolvable:$true] %s21
      %27 = dma.hbm_to_vmem [thread:$0]  %s20, 256, %s22, [#allocation3], 128, 128, 8
    $region5: #{tpu_custom_call.1} parent=1 // pred_fallthru
      _
    // Predicated region
    $region6: #{tpu_custom_call.1} parent=1 // pred_check
      _
    $region7: #{tpu_custom_call.1} parent=1 // pred_check_branch
      %29 = sbr.rel (0) target = $region9
    $region8: #{tpu_custom_call.1} parent=1 // pred_region
      %s30 = sadd.s32 0, 0
      %p31 = scmp.lt.s32.totalorder %s30, 0
      %s32 = scalar_select %p31, %s30, 0
      %s33 = smul.u32 2, %s32
      %s35 = ssub.s32 256, 256
      %36 = vsyncadd [#allocation6], %s35
      %s37 = smul.addr %s33, 128
      %s38 = scalar_lea.hbm %s1, %s37
      %s39 = sshll.u32 [#allocation5], 4
      %s40 = int_to_ptr.vmem [resolvable:$true] %s39
      %45 = dma.hbm_to_vmem [thread:$0]  %s38, 256, %s40, [#allocation6], 128, 128, 8
    $region9: #{tpu_custom_call.1} parent=1 // pred_fallthru
      _
    // Predicated region
    $region10: #{tpu_custom_call.1} parent=1 // pred_check
      _
    $region11: #{tpu_custom_call.1} parent=1 // pred_check_branch
      %47 = sbr.rel (0) target = $region13
    $region12: #{tpu_custom_call.1} parent=1 // pred_region
      %48 = dma.done [#allocation3], 256
    $region13: #{tpu_custom_call.1} parent=1 // pred_fallthru
      _
    // Predicated region
    $region14: #{tpu_custom_call.1} parent=1 // pred_check
      _
    $region15: #{tpu_custom_call.1} parent=1 // pred_check_branch
      %50 = sbr.rel (0) target = $region17
    $region16: #{tpu_custom_call.1} parent=1 // pred_region
      %51 = dma.done [#allocation6], 256
    $region17: #{tpu_custom_call.1} parent=1 // pred_fallthru
      _
    %s52 = sadd.s32 0, 0
    %p53 = scmp.lt.s32.totalorder %s52, 0
    %s54 = scalar_select %p53, %s52, 0
    %s55 = smul.u32 2, %s54
    %s56 = sadd.s32 0, 0
    %p57 = scmp.lt.s32.totalorder %s56, 0
    %s58 = scalar_select %p57, %s56, 0
    %s59 = smul.u32 2, %s58
    %p60 = scmp.eq.s32.totalorder 0, 0
    // Predicated region
    $region18: #{tpu_custom_call.1} parent=1 // pred_check
      %p61 = pneg %p60
    $region19: #{tpu_custom_call.1} parent=1 // pred_check_branch
      %63 = sbr.rel (%p61) target = $region21
    $region20: #{tpu_custom_call.1} parent=1 // pred_region
      %64 = vst [vmem:[#allocation7] sm:$0x1] 0.0
      %65 = vst [vmem:[#allocation7 + $0x1] sm:$0x1] 0.0
      %66 = vst [vmem:[#allocation7 + $0x2] sm:$0x1] 0.0
      %67 = vst [vmem:[#allocation7 + $0x3] sm:$0x1] 0.0
      %68 = vst [vmem:[#allocation7 + $0x4] sm:$0x1] 0.0
      %69 = vst [vmem:[#allocation7 + $0x5] sm:$0x1] 0.0
    $region21: #{tpu_custom_call.1} parent=1 // pred_fallthru
      _
    %v70 = vld [vmem:[#allocation2] sm:$0xff]
    %v71 = vld [vmem:[#allocation2 + $0x8] sm:$0xff]
    %v72 = vld [vmem:[#allocation5] sm:$0xff]
    %v73 = vld [vmem:[#allocation5 + $0x8] sm:$0xff]
    %v74 = vxor.u32 %v70, 2147483648
    %v75 = vxor.u32 %v71, 2147483648
    %v76 = vmul.f32 %v74, 1.442695
    %v77 = vpow.pop %v76
    %v78 = vmul.f32 %v75, 1.442695
    %v79 = vpow.pop %v78
    %v80 = vadd.f32 %v77, 1.0
    %v81 = vadd.f32 %v79, 1.0
    %v82 = vrcp.pop %v80
    %v83 = vmul.f32 1.0, %v82
    %v84 = vrcp.pop %v81
    %v85 = vmul.f32 1.0, %v84
    %v86 = vld [vmem:[#allocation7] sm:$0x1]
    %v87 = vmul.f32 %v70, %v72
    %v88 = vmul.f32 %v71, %v73
    %v89 = vadd.f32 %v87, %v88
    %v90 = vrot.slane %v89, 4
    %v91 = vadd.f32 %v89, %v90
    %v92 = vrot.slane %v91, 2
    %v93 = vadd.f32 %v91, %v92
    %v94 = vrot.slane %v93, 1
    %v95 = vadd.f32 %v93, %v94
    %v96 = vadd.f32 %v86, %v95
    %97 = vst [vmem:[#allocation7] sm:$0x1] %v96
    %s98 = scalar_lea.vmem [#allocation7], 1
    %v99 = vld [vmem:[%s98] sm:$0x1]
    %v100 = vadd.f32 %v70, %v71
    %v101 = vrot.slane %v100, 4
    %v102 = vadd.f32 %v100, %v101
    %v103 = vrot.slane %v102, 2
    %v104 = vadd.f32 %v102, %v103
    %v105 = vrot.slane %v104, 1
    %v106 = vadd.f32 %v104, %v105
    %v107 = vadd.f32 %v99, %v106
    %108 = vst [vmem:[%s98] sm:$0x1] %v107
    %s109 = scalar_lea.vmem [#allocation7], 2
    %v110 = vld [vmem:[%s109] sm:$0x1]
    %v111 = vmul.f32 %v83, %v72
    %v112 = vmul.f32 %v85, %v73
    %v113 = vadd.f32 %v111, %v112
    %v114 = vrot.slane %v113, 4
    %v115 = vadd.f32 %v113, %v114
    %v116 = vrot.slane %v115, 2
    %v117 = vadd.f32 %v115, %v116
    %v118 = vrot.slane %v117, 1
    %v119 = vadd.f32 %v117, %v118
    %v120 = vadd.f32 %v110, %v119
    %121 = vst [vmem:[%s109] sm:$0x1] %v120
    %s122 = scalar_lea.vmem [#allocation7], 3
    %v123 = vld [vmem:[%s122] sm:$0x1]
    %v124 = vadd.f32 %v83, %v85
    %v125 = vrot.slane %v124, 4
    %v126 = vadd.f32 %v124, %v125
    %v127 = vrot.slane %v126, 2
    %v128 = vadd.f32 %v126, %v127
    %v129 = vrot.slane %v128, 1
    %v130 = vadd.f32 %v128, %v129
    %v131 = vadd.f32 %v123, %v130
    %132 = vst [vmem:[%s122] sm:$0x1] %v131
    %s133 = scalar_lea.vmem [#allocation7], 4
    %v134 = vld [vmem:[%s133] sm:$0x1]
    %v135 = vadd.f32 %v72, %v73
    %v136 = vrot.slane %v135, 4
    %v137 = vadd.f32 %v135, %v136
    %v138 = vrot.slane %v137, 2
    %v139 = vadd.f32 %v137, %v138
    %v140 = vrot.slane %v139, 1
    %v141 = vadd.f32 %v139, %v140
    %v142 = vadd.f32 %v134, %v141
    %143 = vst [vmem:[%s133] sm:$0x1] %v142
    %s144 = scalar_lea.vmem [#allocation7], 5
    %v145 = vld [vmem:[%s144] sm:$0x1]
    %v146 = vmax.f32 %v70, %v71
    %v147 = vrot.slane %v146, 4
    %v148 = vmax.f32 %v146, %v147
    %v149 = vrot.slane %v148, 2
    %v150 = vmax.f32 %v148, %v149
    %v151 = vrot.slane %v150, 1
    %v152 = vmax.f32 %v150, %v151
    %v153 = vmax.f32 %v145, %v152
    %154 = vst [vmem:[%s144] sm:$0x1] %v153
    // Predicated region
    $region22: #{tpu_custom_call.1} parent=1 // pred_check
      _
    $region23: #{tpu_custom_call.1} parent=1 // pred_check_branch
      %156 = sbr.rel (0) target = $region25
    $region24: #{tpu_custom_call.1} parent=1 // pred_region
      %s158 = ssub.s32 96, 96
      %159 = vsyncadd [#allocation4], %s158
      %s160 = sshll.u32 [#allocation7], 4
      %s161 = int_to_ptr.vmem [resolvable:$true] %s160
      %166 = dma.vmem_to_hbm [thread:$0]  %s161, 96, %s2, [#allocation4], 16, 16, 1
    $region25: #{tpu_custom_call.1} parent=1 // pred_fallthru
      _
    // Predicated region
    $region26: #{tpu_custom_call.1} parent=1 // pred_check
      _
    $region27: #{tpu_custom_call.1} parent=1 // pred_check_branch
      %168 = sbr.rel (0) target = $region29
    $region28: #{tpu_custom_call.1} parent=1 // pred_region
      %169 = dma.done [#allocation4], 96
    $region29: #{tpu_custom_call.1} parent=1 // pred_fallthru
      _
    %170 = vsyncpa [#allocation3], 1
    %171 = vsyncpa [#allocation6], 1
    %172 = vsyncpa [#allocation4], 1

</llo_original>
